<compile_context>
chip_gen: v6e
topology: v6e:2x2x1
jax: 0.10.0
libtpu: 0.0.40
codegen_flags: <defaults>
</compile_context>

<pallas_src>
from functools import partial

import jax
import jax.numpy as jnp
import numpy as np
from jax.experimental import pallas as pl
from jax.experimental.pallas import tpu as pltpu


# ---------------------------------------------------------------------------
# Kernels
# ---------------------------------------------------------------------------
def _mxu_pool_kernel(x_ref, w_ref, b_ref, o_ref, *, valid_rows):
    """Pooling folded into the matmul: x (TN, C*HW) @ W_exp (C*HW, O_pad)."""
    x = x_ref[...].astype(jnp.float32)          # bf16-friendly input, f32 accumulate
    res = jnp.dot(x, w_ref[...], preferred_element_type=jnp.float32) + b_ref[...]
    if valid_rows == o_ref.shape[0]:
        o_ref[...] = res                         # full, unmasked lane-dense store
    else:
        o_ref[0:valid_rows, :] = res             # short batch tail; rows >= N sliced off


def _reduce_pool_kernel(x_ref, w_ref, b_ref, o_ref, *, valid_rows, c):
    """Large-C*HW fallback: XLU sum-reduce pooling + small-K MXU matmul."""
    x = x_ref[...].astype(jnp.float32)                        # (TN*C, HW)
    pooled = jnp.sum(x, axis=-1).reshape(valid_rows, c)       # 1/HW folded into w
    res = jnp.dot(pooled, w_ref[...], preferred_element_type=jnp.float32) + b_ref[...]
    if valid_rows == o_ref.shape[0]:
        o_ref[...] = res
    else:
        o_ref[0:valid_rows, :] = res


# ---------------------------------------------------------------------------
# One-time parameter preparation (hoisted out of the per-call path)
# ---------------------------------------------------------------------------
def prepare_header_params(w1, b1, H, W, *, mxu_pool_bytes_limit=8 << 20):
    """Transpose, fold 1/(H*W), pad O to a lane-full 128 multiple and (for small
    C*HW) expand the weight so the pooling runs on the MXU. Call once at init."""
    O, C = int(w1.shape[0]), int(w1.shape[1])
    HW = H * W
    O_pad = ((O + 127) // 128) * 128
    inv_hw = 1.0 / float(HW)

    w2d = jnp.transpose(w1.reshape(O, C), (1, 0)).astype(jnp.float32) * inv_hw  # (C, O)
    w2d = jnp.pad(w2d, ((0, 0), (0, O_pad - O)))
    bk = jnp.pad(b1.reshape(1, O).astype(jnp.float32), ((0, 0), (0, O_pad - O)))

    use_mxu_pool = (C * HW * O_pad * 4) <= mxu_pool_bytes_limit
    if use_mxu_pool:
        # W_exp[c*HW + hw, o] = w[o, c] / HW  -- matches x.reshape(N, C*HW) layout.
        wk = jnp.repeat(w2d, HW, axis=0)                                         # (C*HW, O_pad)
    else:
        wk = w2d                                                                  # (C, O_pad)

    return {"wk": wk, "bk": bk, "O": O, "O_pad": O_pad, "C": C, "HW": HW,
            "use_mxu_pool": use_mxu_pool}


# ---------------------------------------------------------------------------
# Forward
# ---------------------------------------------------------------------------
def header_forward(x_nchw, params, *, x_tile_bytes=4 << 20):
    """x_nchw: (N, C, H, W) (f32 or bf16). Returns 3 identical (N, 168, 1) logits."""
    N, C, H, W = x_nchw.shape
    HW = H * W
    assert C == params["C"] and HW == params["HW"]
    O, O_pad = params["O"], params["O_pad"]
    wk, bk = params["wk"], params["bk"]
    use_mxu_pool = params["use_mxu_pool"]

    # Batch-row tiling: bounds per-tile VMEM (v7x 64 MiB safe with 2x buffering)
    # and lets BlockSpec pipeline the x DMA under compute. Larger x_tile_bytes
    # can be used on v5e/v6e (128 MiB VMEM) to amortize the ~0.35us/step cost.
    itemsize = x_nchw.dtype.itemsize
    row_bytes = C * HW * itemsize
    tn_budget = max(8, (x_tile_bytes // row_bytes) // 8 * 8)
    if N <= tn_budget:
        num_tiles = 1
        tn_in = N                            # full-array block: legal for any N, no pad copy
        tn_out = max(8, ((N + 7) // 8) * 8)  # sublane-full output block
    else:
        tn_in = tn_budget                    # multiple of 8; last tile may be partial (garbage
        tn_out = tn_in                       # rows land past N and are sliced off below)
        num_tiles = pl.cdiv(N, tn_in)
    out_rows = num_tiles * tn_out

    if use_mxu_pool:
        x2d = x_nchw.reshape(N, C * HW)      # contiguous reshape: no HBM copy
        x_spec = pl.BlockSpec((tn_in, C * HW), lambda i: (i, 0))
        w_spec = pl.BlockSpec((C * HW, O_pad), lambda i: (0, 0))   # VMEM-resident
        kernel = partial(_mxu_pool_kernel, valid_rows=tn_in)
        flops = 2 * N * (C * HW) * O_pad
    else:
        x2d = x_nchw.reshape(N * C, HW)
        x_spec = pl.BlockSpec((tn_in * C, HW), lambda i: (i, 0))
        w_spec = pl.BlockSpec((C, O_pad), lambda i: (0, 0))
        kernel = partial(_reduce_pool_kernel, valid_rows=tn_in, c=C)
        flops = N * C * HW + 2 * N * C * O_pad

    # Explicit VMEM limit with headroom (double-buffered x + resident weights).
    # (With num_tiles == 1 the second x buffer is wasted; pl.Buffered(1) could
    # reclaim it but is skipped here to keep the compile path conservative.)
    x_tile = tn_in * C * HW * itemsize
    vmem_need = 2 * x_tile + wk.size * 4 + bk.size * 4 + 2 * tn_out * O_pad * 4
    vmem_limit = int(min(64 << 20, max(2 * vmem_need, 8 << 20)))

    cost = pl.CostEstimate(
        flops=int(flops),
        transcendentals=0,
        bytes_accessed=int(x2d.size * itemsize + wk.size * 4 + bk.size * 4
                           + out_rows * O_pad * 4),
    )

    out = pl.pallas_call(
        kernel,
        grid=(num_tiles,),
        in_specs=[x_spec, w_spec, pl.BlockSpec((1, O_pad), lambda i: (0, 0))],
        out_specs=pl.BlockSpec((tn_out, O_pad), lambda i: (i, 0)),
        out_shape=jax.ShapeDtypeStruct((out_rows, O_pad), jnp.float32),
        compiler_params=pltpu.CompilerParams(
            dimension_semantics=("parallel",),   # shards row tiles across v7x's 2 TCs
            vmem_limit_bytes=vmem_limit),
        cost_estimate=cost,
    )(x2d, wk, bk)

    # Slice off N/O padding; torch.squeeze(dim=-1) on (N, O, 1, 1) -> (N, O, 1).
    logits = out[:N, :O][..., None]
    # forward applies last_1 three times -> three identical tensors.
    return logits, logits, logits


# ---------------------------------------------------------------------------
# Pure-JAX reference
# ---------------------------------------------------------------------------
def header_reference(x_nchw, w1, b1):
    pooled = jnp.mean(x_nchw.astype(jnp.float32), axis=(2, 3))   # (N, C)
    out = pooled @ w1.reshape(w1.shape[0], -1).T + b1            # (N, 168)
    out = out[..., None]                                          # (N, 168, 1)
    return out, out, out


if __name__ == "__main__":
    key = jax.random.PRNGKey(0)
    k_x, k_w1, k_b1, k_w2, k_b2, k_w3, k_b3 = jax.random.split(key, 7)

    N, C, H, W = 2, 4, 16, 16          # batch=2, input_dims=4, spatial=16
    input_dims = C

    # f32 input here to keep the 1e-5 tolerance check; the kernel also accepts
    # bf16 from a producer (upcast + f32 accumulation happen inside).
    x = jax.random.normal(k_x, (N, C, H, W), dtype=jnp.float32)

    w1 = jax.random.normal(k_w1, (168, input_dims, 1, 1), jnp.float32) * 0.1
    b1 = jax.random.normal(k_b1, (168,), jnp.float32) * 0.1
    # last_2 / last_3 exist in __init__ but are unused by forward.
    w2 = jax.random.normal(k_w2, (11, input_dims, 1, 1), jnp.float32) * 0.1
    b2 = jax.random.normal(k_b2, (11,), jnp.float32) * 0.1
    w3 = jax.random.normal(k_w3, (7, input_dims, 1, 1), jnp.float32) * 0.1
    b3 = jax.random.normal(k_b3, (7,), jnp.float32) * 0.1

    refs = header_reference(x, w1, b1)

    # Path 1 (auto-selected at this shape): pooling folded into the MXU matmul.
    params_mxu = prepare_header_params(w1, b1, H, W)
    assert params_mxu["use_mxu_pool"]
    outs = jax.block_until_ready(header_forward(x, params_mxu))
    for o, r in zip(outs, refs):
        assert o.shape == (N, 168, 1), o.shape
        np.testing.assert_allclose(np.asarray(o), np.asarray(r), rtol=1e-5, atol=1e-5)

    # Path 2 (large-C*HW fallback): XLU sum-reduce pooling + small-K matmul.
    params_red = prepare_header_params(w1, b1, H, W, mxu_pool_bytes_limit=0)
    assert not params_red["use_mxu_pool"]
    outs_r = jax.block_until_ready(header_forward(x, params_red))
    for o, r in zip(outs_r, refs):
        assert o.shape == (N, 168, 1), o.shape
        np.testing.assert_allclose(np.asarray(o), np.asarray(r), rtol=1e-5, atol=1e-5)

    print("KERNEL_OK")
</pallas_src>

<mosaic_0001>
module attributes {stable_mosaic.version = 11 : i64} {
  func.func @_mxu_pool_kernel(%arg0: i32, %arg1: memref<2x1024xf32, #tpu.memory_space<vmem>>, %arg2: memref<1024x256xf32, #tpu.memory_space<vmem>>, %arg3: memref<1x256xf32, #tpu.memory_space<vmem>>, %arg4: memref<8x256xf32, #tpu.memory_space<vmem>>) attributes {dimension_semantics = [#tpu.dimension_semantics<parallel>], iteration_bounds = array<i64: 1>, scalar_prefetch = 0 : i64, scratch_operands = 0 : i64, tpu.core_type = #tpu.core_type<tc>, window_params = [{transform_indices = @transform_0, window_bounds = array<i64: 2, 1024>}, {pipeline_mode = #tpu.pipeline_mode<synchronous>, transform_indices = @transform_1, window_bounds = array<i64: 1024, 256>}, {pipeline_mode = #tpu.pipeline_mode<synchronous>, transform_indices = @transform_2, window_bounds = array<i64: 1, 256>}, {transform_indices = @transform_3, window_bounds = array<i64: 8, 256>}]} {
    %c0 = arith.constant 0 : index
    %c0_0 = arith.constant 0 : index
    %0 = vector.load %arg1[%c0, %c0_0] : memref<2x1024xf32, #tpu.memory_space<vmem>>, vector<2x1024xf32>
    %c0_1 = arith.constant 0 : index
    %c0_2 = arith.constant 0 : index
    %1 = vector.load %arg2[%c0_1, %c0_2] : memref<1024x256xf32, #tpu.memory_space<vmem>>, vector<1024x256xf32>
    %cst = arith.constant dense<0.000000e+00> : vector<2x256xf32>
    %2 = tpu.matmul %0, %1, %cst {dimension_numbers = #tpu.dot_dimension_numbers<[1], [0], [0], [1], [0, 0, 1, 1], [], []>} : vector<2x1024xf32>, vector<1024x256xf32>, vector<2x256xf32> -> vector<2x256xf32>
    %c0_3 = arith.constant 0 : index
    %c0_4 = arith.constant 0 : index
    %3 = vector.load %arg3[%c0_3, %c0_4] : memref<1x256xf32, #tpu.memory_space<vmem>>, vector<1x256xf32>
    %4 = vector.broadcast %3 : vector<1x256xf32> to vector<2x256xf32>
    %5 = arith.addf %2, %4 : vector<2x256xf32>
    %c0_5 = arith.constant 0 : index
    %c0_6 = arith.constant 0 : index
    %6 = vector.load %arg4[%c0_5, %c0_6] : memref<8x256xf32, #tpu.memory_space<vmem>>, vector<2x256xf32>
    tpu.vector_store %arg4[%c0_5, %c0_6], %5 {strides = array<i32>} : memref<8x256xf32, #tpu.memory_space<vmem>>, vector<2x256xf32>,
    return
  }
  func.func @transform_0(%arg0: i32) -> (i32, i32) {
    %c0_i32 = arith.constant 0 : i32
    %c0_i32_0 = arith.constant 0 : i32
    return %arg0, %c0_i32 : i32, i32
  }
  func.func @transform_1(%arg0: i32) -> (i32, i32) {
    %c0_i32 = arith.constant 0 : i32
    %c0_i32_0 = arith.constant 0 : i32
    %c0_i32_1 = arith.constant 0 : i32
    return %c0_i32, %c0_i32_0 : i32, i32
  }
  func.func @transform_2(%arg0: i32) -> (i32, i32) {
    %c0_i32 = arith.constant 0 : i32
    %c0_i32_0 = arith.constant 0 : i32
    %c0_i32_1 = arith.constant 0 : i32
    return %c0_i32, %c0_i32_0 : i32, i32
  }
  func.func @transform_3(%arg0: i32) -> (i32, i32) {
    %c0_i32 = arith.constant 0 : i32
    %c0_i32_0 = arith.constant 0 : i32
    return %arg0, %c0_i32 : i32, i32
  }
}

</mosaic_0001>

<llo_original>
// kernel: tpu_custom_call.1
$region0: #{tpu_custom_call.1}
  #allocation0 [shape = 'u32[]', space=smem, size = 0x4, offset = 0x4, fixed_abs, tag = 'smem constant byte address 0x4 - core index']
  #allocation1 [shape = 'u32[144,128]{1,0:T(1,128)}', space=vmem, size = 0x12000, scoped, tag = 'internal scratch']
  %s0 = inlined_call_operand.hbm [shape: f32[2,1024], index: 0, kind: input, shape index: {}]
  %s1 = inlined_call_operand.hbm [shape: f32[1024,256], index: 1, kind: input, shape index: {}]
  %s2 = inlined_call_operand.vmem [shape: f32[1,256], index: 2, kind: input, shape index: {}]
  %s3 = inlined_call_operand.hbm [shape: f32[8,256], index: 3, kind: output, shape index: {}]
  %s4 = sld [smem:[#allocation0]]
  $region30: #{tpu_custom_call.1} parent=0
    _
  %s6 = ssub.s32 1, %s4
  %s7 = scalar_select 0, %s6, %s4
  $region1: #{tpu_custom_call.1} parent=0
    #allocation2 [shape = 'u8[8192]{0}', space=vmem, size = 0x2000, scoped, tag = 'input window, operand 0, single buffered']
    #allocation3 [shape = 's32[1]{0}', space=sflag, size = 0x4, scoped, tag = 'scoped memory for tpu_custom_call.1']
    #allocation4 [shape = 's32[1]{0}', space=sflag, size = 0x4, scoped, tag = 'scoped memory for tpu_custom_call.1']
    #allocation5 [shape = 'u8[1048576]{0}', space=vmem, size = 0x100000, scoped, tag = 'input window, operand 1, single buffered']
    #allocation6 [shape = 's32[1]{0}', space=sflag, size = 0x4, scoped, tag = 'scoped memory for tpu_custom_call.1']
    #allocation7 [shape = 'u8[8192]{0}', space=vmem, size = 0x2000, scoped, tag = 'output window, operand 0, single buffered']
    %8 = vsyncpa [#allocation3], 0
    %9 = vsyncpa [#allocation6], 0
    %10 = vsyncpa [#allocation4], 0
    // Predicated region
    $region2: #{tpu_custom_call.1} parent=1 // pred_check
      _
    $region3: #{tpu_custom_call.1} parent=1 // pred_check_branch
      %12 = sbr.rel (0) target = $region5
    $region4: #{tpu_custom_call.1} parent=1 // pred_region
      %s14 = ssub.s32 256, 256
      %15 = vsyncadd [#allocation3], %s14
      %s17 = sshll.u32 [#allocation2], 4
      %s18 = int_to_ptr.vmem [resolvable:$true] %s17
      %20 = dma.hbm_to_vmem [thread:$0]  %s0, 256, %s18, [#allocation3]
    $region5: #{tpu_custom_call.1} parent=1 // pred_fallthru
      _
    // Predicated region
    $region6: #{tpu_custom_call.1} parent=1 // pred_check
      _
    $region7: #{tpu_custom_call.1} parent=1 // pred_check_branch
      %22 = sbr.rel (0) target = $region9
    $region8: #{tpu_custom_call.1} parent=1 // pred_region
      %s24 = ssub.s32 32768, 32768
      %25 = vsyncadd [#allocation6], %s24
      %s26 = sshll.u32 [#allocation5], 4
      %s27 = int_to_ptr.vmem [resolvable:$true] %s26
      %32 = dma.hbm_to_vmem [thread:$0]  %s1, 32768, %s27, [#allocation6], 256, 256, 16
    $region9: #{tpu_custom_call.1} parent=1 // pred_fallthru
      _
    // Predicated region
    $region10: #{tpu_custom_call.1} parent=1 // pred_check
      _
    $region11: #{tpu_custom_call.1} parent=1 // pred_check_branch
      %34 = sbr.rel (0) target = $region13
    $region12: #{tpu_custom_call.1} parent=1 // pred_region
      _
    $region13: #{tpu_custom_call.1} parent=1 // pred_fallthru
      _
    // Predicated region
    $region14: #{tpu_custom_call.1} parent=1 // pred_check
      _
    $region15: #{tpu_custom_call.1} parent=1 // pred_check_branch
      %36 = sbr.rel (0) target = $region17
    $region16: #{tpu_custom_call.1} parent=1 // pred_region
      %37 = dma.done [#allocation3], 256
    $region17: #{tpu_custom_call.1} parent=1 // pred_fallthru
      _
    // Predicated region
    $region18: #{tpu_custom_call.1} parent=1 // pred_check
      _
    $region19: #{tpu_custom_call.1} parent=1 // pred_check_branch
      %39 = sbr.rel (0) target = $region21
    $region20: #{tpu_custom_call.1} parent=1 // pred_region
      %40 = dma.done [#allocation6], 32768
    $region21: #{tpu_custom_call.1} parent=1 // pred_fallthru
      _
    %v41 = vld [vmem:[#allocation2] sm:$0xff]
    %v42 = vld [vmem:[#allocation2 + $0x8] sm:$0xff]
    %v43 = vld [vmem:[#allocation5] sm:$0xff]
    %v44 = vld [vmem:[#allocation5 + $0x8] sm:$0xff]
    %v45 = vld [vmem:[#allocation5 + $0x10] sm:$0xff]
    %v46 = vld [vmem:[#allocation5 + $0x18] sm:$0xff]
    %v47 = vld [vmem:[#allocation5 + $0x20] sm:$0xff]
    %v48 = vld [vmem:[#allocation5 + $0x28] sm:$0xff]
    %v49 = vld [vmem:[#allocation5 + $0x30] sm:$0xff]
    %v50 = vld [vmem:[#allocation5 + $0x38] sm:$0xff]
    %v51 = vld [vmem:[#allocation5 + $0x40] sm:$0xff]
    %v52 = vld [vmem:[#allocation5 + $0x48] sm:$0xff]
    %v53 = vld [vmem:[#allocation5 + $0x50] sm:$0xff]
    %v54 = vld [vmem:[#allocation5 + $0x58] sm:$0xff]
    %v55 = vld [vmem:[#allocation5 + $0x60] sm:$0xff]
    %v56 = vld [vmem:[#allocation5 + $0x68] sm:$0xff]
    %v57 = vld [vmem:[#allocation5 + $0x70] sm:$0xff]
    %v58 = vld [vmem:[#allocation5 + $0x78] sm:$0xff]
    %v59 = vld [vmem:[#allocation5 + $0x80] sm:$0xff]
    %v60 = vld [vmem:[#allocation5 + $0x88] sm:$0xff]
    %v61 = vld [vmem:[#allocation5 + $0x90] sm:$0xff]
    %v62 = vld [vmem:[#allocation5 + $0x98] sm:$0xff]
    %v63 = vld [vmem:[#allocation5 + $0xa0] sm:$0xff]
    %v64 = vld [vmem:[#allocation5 + $0xa8] sm:$0xff]
    %v65 = vld [vmem:[#allocation5 + $0xb0] sm:$0xff]
    %v66 = vld [vmem:[#allocation5 + $0xb8] sm:$0xff]
    %v67 = vld [vmem:[#allocation5 + $0xc0] sm:$0xff]
    %v68 = vld [vmem:[#allocation5 + $0xc8] sm:$0xff]
    %v69 = vld [vmem:[#allocation5 + $0xd0] sm:$0xff]
    %v70 = vld [vmem:[#allocation5 + $0xd8] sm:$0xff]
    %v71 = vld [vmem:[#allocation5 + $0xe0] sm:$0xff]
    %v72 = vld [vmem:[#allocation5 + $0xe8] sm:$0xff]
    %v73 = vld [vmem:[#allocation5 + $0xf0] sm:$0xff]
    %v74 = vld [vmem:[#allocation5 + $0xf8] sm:$0xff]
    %v75 = vld [vmem:[#allocation5 + $0x100] sm:$0xff]
    %v76 = vld [vmem:[#allocation5 + $0x108] sm:$0xff]
    %v77 = vld [vmem:[#allocation5 + $0x110] sm:$0xff]
    %v78 = vld [vmem:[#allocation5 + $0x118] sm:$0xff]
    %v79 = vld [vmem:[#allocation5 + $0x120] sm:$0xff]
    %v80 = vld [vmem:[#allocation5 + $0x128] sm:$0xff]
    %v81 = vld [vmem:[#allocation5 + $0x130] sm:$0xff]
    %v82 = vld [vmem:[#allocation5 + $0x138] sm:$0xff]
    %v83 = vld [vmem:[#allocation5 + $0x140] sm:$0xff]
    %v84 = vld [vmem:[#allocation5 + $0x148] sm:$0xff]
    %v85 = vld [vmem:[#allocation5 + $0x150] sm:$0xff]
    %v86 = vld [vmem:[#allocation5 + $0x158] sm:$0xff]
    %v87 = vld [vmem:[#allocation5 + $0x160] sm:$0xff]
    %v88 = vld [vmem:[#allocation5 + $0x168] sm:$0xff]
    %v89 = vld [vmem:[#allocation5 + $0x170] sm:$0xff]
    %v90 = vld [vmem:[#allocation5 + $0x178] sm:$0xff]
    %v91 = vld [vmem:[#allocation5 + $0x180] sm:$0xff]
    %v92 = vld [vmem:[#allocation5 + $0x188] sm:$0xff]
    %v93 = vld [vmem:[#allocation5 + $0x190] sm:$0xff]
    %v94 = vld [vmem:[#allocation5 + $0x198] sm:$0xff]
    %v95 = vld [vmem:[#allocation5 + $0x1a0] sm:$0xff]
    %v96 = vld [vmem:[#allocation5 + $0x1a8] sm:$0xff]
    %v97 = vld [vmem:[#allocation5 + $0x1b0] sm:$0xff]
    %v98 = vld [vmem:[#allocation5 + $0x1b8] sm:$0xff]
    %v99 = vld [vmem:[#allocation5 + $0x1c0] sm:$0xff]
    %v100 = vld [vmem:[#allocation5 + $0x1c8] sm:$0xff]
    %v101 = vld [vmem:[#allocation5 + $0x1d0] sm:$0xff]
    %v102 = vld [vmem:[#allocation5 + $0x1d8] sm:$0xff]
    %v103 = vld [vmem:[#allocation5 + $0x1e0] sm:$0xff]
    %v104 = vld [vmem:[#allocation5 + $0x1e8] sm:$0xff]
    %v105 = vld [vmem:[#allocation5 + $0x1f0] sm:$0xff]
    %v106 = vld [vmem:[#allocation5 + $0x1f8] sm:$0xff]
    %v107 = vld [vmem:[#allocation5 + $0x200] sm:$0xff]
    %v108 = vld [vmem:[#allocation5 + $0x208] sm:$0xff]
    %v109 = vld [vmem:[#allocation5 + $0x210] sm:$0xff]
    %v110 = vld [vmem:[#allocation5 + $0x218] sm:$0xff]
    %v111 = vld [vmem:[#allocation5 + $0x220] sm:$0xff]
    %v112 = vld [vmem:[#allocation5 + $0x228] sm:$0xff]
    %v113 = vld [vmem:[#allocation5 + $0x230] sm:$0xff]
    %v114 = vld [vmem:[#allocation5 + $0x238] sm:$0xff]
    %v115 = vld [vmem:[#allocation5 + $0x240] sm:$0xff]
    %v116 = vld [vmem:[#allocation5 + $0x248] sm:$0xff]
    %v117 = vld [vmem:[#allocation5 + $0x250] sm:$0xff]
    %v118 = vld [vmem:[#allocation5 + $0x258] sm:$0xff]
    %v119 = vld [vmem:[#allocation5 + $0x260] sm:$0xff]
    %v120 = vld [vmem:[#allocation5 + $0x268] sm:$0xff]
    %v121 = vld [vmem:[#allocation5 + $0x270] sm:$0xff]
    %v122 = vld [vmem:[#allocation5 + $0x278] sm:$0xff]
    %v123 = vld [vmem:[#allocation5 + $0x280] sm:$0xff]
    %v124 = vld [vmem:[#allocation5 + $0x288] sm:$0xff]
    %v125 = vld [vmem:[#allocation5 + $0x290] sm:$0xff]
    %v126 = vld [vmem:[#allocation5 + $0x298] sm:$0xff]
    %v127 = vld [vmem:[#allocation5 + $0x2a0] sm:$0xff]
    %v128 = vld [vmem:[#allocation5 + $0x2a8] sm:$0xff]
    %v129 = vld [vmem:[#allocation5 + $0x2b0] sm:$0xff]
    %v130 = vld [vmem:[#allocation5 + $0x2b8] sm:$0xff]
    %v131 = vld [vmem:[#allocation5 + $0x2c0] sm:$0xff]
    %v132 = vld [vmem:[#allocation5 + $0x2c8] sm:$0xff]
    %v133 = vld [vmem:[#allocation5 + $0x2d0] sm:$0xff]
    %v134 = vld [vmem:[#allocation5 + $0x2d8] sm:$0xff]
    %v135 = vld [vmem:[#allocation5 + $0x2e0] sm:$0xff]
    %v136 = vld [vmem:[#allocation5 + $0x2e8] sm:$0xff]
    %v137 = vld [vmem:[#allocation5 + $0x2f0] sm:$0xff]
    %v138 = vld [vmem:[#allocation5 + $0x2f8] sm:$0xff]
    %v139 = vld [vmem:[#allocation5 + $0x300] sm:$0xff]
    %v140 = vld [vmem:[#allocation5 + $0x308] sm:$0xff]
    %v141 = vld [vmem:[#allocation5 + $0x310] sm:$0xff]
    %v142 = vld [vmem:[#allocation5 + $0x318] sm:$0xff]
    %v143 = vld [vmem:[#allocation5 + $0x320] sm:$0xff]
    %v144 = vld [vmem:[#allocation5 + $0x328] sm:$0xff]
    %v145 = vld [vmem:[#allocation5 + $0x330] sm:$0xff]
    %v146 = vld [vmem:[#allocation5 + $0x338] sm:$0xff]
    %v147 = vld [vmem:[#allocation5 + $0x340] sm:$0xff]
    %v148 = vld [vmem:[#allocation5 + $0x348] sm:$0xff]
    %v149 = vld [vmem:[#allocation5 + $0x350] sm:$0xff]
    %v150 = vld [vmem:[#allocation5 + $0x358] sm:$0xff]
    %v151 = vld [vmem:[#allocation5 + $0x360] sm:$0xff]
    %v152 = vld [vmem:[#allocation5 + $0x368] sm:$0xff]
    %v153 = vld [vmem:[#allocation5 + $0x370] sm:$0xff]
    %v154 = vld [vmem:[#allocation5 + $0x378] sm:$0xff]
    %v155 = vld [vmem:[#allocation5 + $0x380] sm:$0xff]
    %v156 = vld [vmem:[#allocation5 + $0x388] sm:$0xff]
    %v157 = vld [vmem:[#allocation5 + $0x390] sm:$0xff]
    %v158 = vld [vmem:[#allocation5 + $0x398] sm:$0xff]
    %v159 = vld [vmem:[#allocation5 + $0x3a0] sm:$0xff]
    %v160 = vld [vmem:[#allocation5 + $0x3a8] sm:$0xff]
    %v161 = vld [vmem:[#allocation5 + $0x3b0] sm:$0xff]
    %v162 = vld [vmem:[#allocation5 + $0x3b8] sm:$0xff]
    %v163 = vld [vmem:[#allocation5 + $0x3c0] sm:$0xff]
    %v164 = vld [vmem:[#allocation5 + $0x3c8] sm:$0xff]
    %v165 = vld [vmem:[#allocation5 + $0x3d0] sm:$0xff]
    %v166 = vld [vmem:[#allocation5 + $0x3d8] sm:$0xff]
    %v167 = vld [vmem:[#allocation5 + $0x3e0] sm:$0xff]
    %v168 = vld [vmem:[#allocation5 + $0x3e8] sm:$0xff]
    %v169 = vld [vmem:[#allocation5 + $0x3f0] sm:$0xff]
    %v170 = vld [vmem:[#allocation5 + $0x3f8] sm:$0xff]
    %v171 = vld [vmem:[#allocation5 + $0x400] sm:$0xff]
    %v172 = vld [vmem:[#allocation5 + $0x408] sm:$0xff]
    %v173 = vld [vmem:[#allocation5 + $0x410] sm:$0xff]
    %v174 = vld [vmem:[#allocation5 + $0x418] sm:$0xff]
    %v175 = vld [vmem:[#allocation5 + $0x420] sm:$0xff]
    %v176 = vld [vmem:[#allocation5 + $0x428] sm:$0xff]
    %v177 = vld [vmem:[#allocation5 + $0x430] sm:$0xff]
    %v178 = vld [vmem:[#allocation5 + $0x438] sm:$0xff]
    %v179 = vld [vmem:[#allocation5 + $0x440] sm:$0xff]
    %v180 = vld [vmem:[#allocation5 + $0x448] sm:$0xff]
    %v181 = vld [vmem:[#allocation5 + $0x450] sm:$0xff]
    %v182 = vld [vmem:[#allocation5 + $0x458] sm:$0xff]
    %v183 = vld [vmem:[#allocation5 + $0x460] sm:$0xff]
    %v184 = vld [vmem:[#allocation5 + $0x468] sm:$0xff]
    %v185 = vld [vmem:[#allocation5 + $0x470] sm:$0xff]
    %v186 = vld [vmem:[#allocation5 + $0x478] sm:$0xff]
    %v187 = vld [vmem:[#allocation5 + $0x480] sm:$0xff]
    %v188 = vld [vmem:[#allocation5 + $0x488] sm:$0xff]
    %v189 = vld [vmem:[#allocation5 + $0x490] sm:$0xff]
    %v190 = vld [vmem:[#allocation5 + $0x498] sm:$0xff]
    %v191 = vld [vmem:[#allocation5 + $0x4a0] sm:$0xff]
    %v192 = vld [vmem:[#allocation5 + $0x4a8] sm:$0xff]
    %v193 = vld [vmem:[#allocation5 + $0x4b0] sm:$0xff]
    %v194 = vld [vmem:[#allocation5 + $0x4b8] sm:$0xff]
    %v195 = vld [vmem:[#allocation5 + $0x4c0] sm:$0xff]
    %v196 = vld [vmem:[#allocation5 + $0x4c8] sm:$0xff]
    %v197 = vld [vmem:[#allocation5 + $0x4d0] sm:$0xff]
    %v198 = vld [vmem:[#allocation5 + $0x4d8] sm:$0xff]
    %v199 = vld [vmem:[#allocation5 + $0x4e0] sm:$0xff]
    %v200 = vld [vmem:[#allocation5 + $0x4e8] sm:$0xff]
    %v201 = vld [vmem:[#allocation5 + $0x4f0] sm:$0xff]
    %v202 = vld [vmem:[#allocation5 + $0x4f8] sm:$0xff]
    %v203 = vld [vmem:[#allocation5 + $0x500] sm:$0xff]
    %v204 = vld [vmem:[#allocation5 + $0x508] sm:$0xff]
    %v205 = vld [vmem:[#allocation5 + $0x510] sm:$0xff]
    %v206 = vld [vmem:[#allocation5 + $0x518] sm:$0xff]
    %v207 = vld [vmem:[#allocation5 + $0x520] sm:$0xff]
    %v208 = vld [vmem:[#allocation5 + $0x528] sm:$0xff]
    %v209 = vld [vmem:[#allocation5 + $0x530] sm:$0xff]
    %v210 = vld [vmem:[#allocation5 + $0x538] sm:$0xff]
    %v211 = vld [vmem:[#allocation5 + $0x540] sm:$0xff]
    %v212 = vld [vmem:[#allocation5 + $0x548] sm:$0xff]
    %v213 = vld [vmem:[#allocation5 + $0x550] sm:$0xff]
    %v214 = vld [vmem:[#allocation5 + $0x558] sm:$0xff]
    %v215 = vld [vmem:[#allocation5 + $0x560] sm:$0xff]
    %v216 = vld [vmem:[#allocation5 + $0x568] sm:$0xff]
    %v217 = vld [vmem:[#allocation5 + $0x570] sm:$0xff]
    %v218 = vld [vmem:[#allocation5 + $0x578] sm:$0xff]
    %v219 = vld [vmem:[#allocation5 + $0x580] sm:$0xff]
    %v220 = vld [vmem:[#allocation5 + $0x588] sm:$0xff]
    %v221 = vld [vmem:[#allocation5 + $0x590] sm:$0xff]
    %v222 = vld [vmem:[#allocation5 + $0x598] sm:$0xff]
    %v223 = vld [vmem:[#allocation5 + $0x5a0] sm:$0xff]
    %v224 = vld [vmem:[#allocation5 + $0x5a8] sm:$0xff]
    %v225 = vld [vmem:[#allocation5 + $0x5b0] sm:$0xff]
    %v226 = vld [vmem:[#allocation5 + $0x5b8] sm:$0xff]
    %v227 = vld [vmem:[#allocation5 + $0x5c0] sm:$0xff]
    %v228 = vld [vmem:[#allocation5 + $0x5c8] sm:$0xff]
    %v229 = vld [vmem:[#allocation5 + $0x5d0] sm:$0xff]
    %v230 = vld [vmem:[#allocation5 + $0x5d8] sm:$0xff]
    %v231 = vld [vmem:[#allocation5 + $0x5e0] sm:$0xff]
    %v232 = vld [vmem:[#allocation5 + $0x5e8] sm:$0xff]
    %v233 = vld [vmem:[#allocation5 + $0x5f0] sm:$0xff]
    %v234 = vld [vmem:[#allocation5 + $0x5f8] sm:$0xff]
    %v235 = vld [vmem:[#allocation5 + $0x600] sm:$0xff]
    %v236 = vld [vmem:[#allocation5 + $0x608] sm:$0xff]
    %v237 = vld [vmem:[#allocation5 + $0x610] sm:$0xff]
    %v238 = vld [vmem:[#allocation5 + $0x618] sm:$0xff]
    %v239 = vld [vmem:[#allocation5 + $0x620] sm:$0xff]
    %v240 = vld [vmem:[#allocation5 + $0x628] sm:$0xff]
    %v241 = vld [vmem:[#allocation5 + $0x630] sm:$0xff]
    %v242 = vld [vmem:[#allocation5 + $0x638] sm:$0xff]
    %v243 = vld [vmem:[#allocation5 + $0x640] sm:$0xff]
    %v244 = vld [vmem:[#allocation5 + $0x648] sm:$0xff]
    %v245 = vld [vmem:[#allocation5 + $0x650] sm:$0xff]
    %v246 = vld [vmem:[#allocation5 + $0x658] sm:$0xff]
    %v247 = vld [vmem:[#allocation5 + $0x660] sm:$0xff]
    %v248 = vld [vmem:[#allocation5 + $0x668] sm:$0xff]
    %v249 = vld [vmem:[#allocation5 + $0x670] sm:$0xff]
    %v250 = vld [vmem:[#allocation5 + $0x678] sm:$0xff]
    %v251 = vld [vmem:[#allocation5 + $0x680] sm:$0xff]
    %v252 = vld [vmem:[#allocation5 + $0x688] sm:$0xff]
    %v253 = vld [vmem:[#allocation5 + $0x690] sm:$0xff]
    %v254 = vld [vmem:[#allocation5 + $0x698] sm:$0xff]
    %v255 = vld [vmem:[#allocation5 + $0x6a0] sm:$0xff]
    %v256 = vld [vmem:[#allocation5 + $0x6a8] sm:$0xff]
    %v257 = vld [vmem:[#allocation5 + $0x6b0] sm:$0xff]
    %v258 = vld [vmem:[#allocation5 + $0x6b8] sm:$0xff]
    %v259 = vld [vmem:[#allocation5 + $0x6c0] sm:$0xff]
    %v260 = vld [vmem:[#allocation5 + $0x6c8] sm:$0xff]
    %v261 = vld [vmem:[#allocation5 + $0x6d0] sm:$0xff]
    %v262 = vld [vmem:[#allocation5 + $0x6d8] sm:$0xff]
    %v263 = vld [vmem:[#allocation5 + $0x6e0] sm:$0xff]
    %v264 = vld [vmem:[#allocation5 + $0x6e8] sm:$0xff]
    %v265 = vld [vmem:[#allocation5 + $0x6f0] sm:$0xff]
    %v266 = vld [vmem:[#allocation5 + $0x6f8] sm:$0xff]
    %v267 = vld [vmem:[#allocation5 + $0x700] sm:$0xff]
    %v268 = vld [vmem:[#allocation5 + $0x708] sm:$0xff]
    %v269 = vld [vmem:[#allocation5 + $0x710] sm:$0xff]
    %v270 = vld [vmem:[#allocation5 + $0x718] sm:$0xff]
    %v271 = vld [vmem:[#allocation5 + $0x720] sm:$0xff]
    %v272 = vld [vmem:[#allocation5 + $0x728] sm:$0xff]
    %v273 = vld [vmem:[#allocation5 + $0x730] sm:$0xff]
    %v274 = vld [vmem:[#allocation5 + $0x738] sm:$0xff]
    %v275 = vld [vmem:[#allocation5 + $0x740] sm:$0xff]
    %v276 = vld [vmem:[#allocation5 + $0x748] sm:$0xff]
    %v277 = vld [vmem:[#allocation5 + $0x750] sm:$0xff]
    %v278 = vld [vmem:[#allocation5 + $0x758] sm:$0xff]
    %v279 = vld [vmem:[#allocation5 + $0x760] sm:$0xff]
    %v280 = vld [vmem:[#allocation5 + $0x768] sm:$0xff]
    %v281 = vld [vmem:[#allocation5 + $0x770] sm:$0xff]
    %v282 = vld [vmem:[#allocation5 + $0x778] sm:$0xff]
    %v283 = vld [vmem:[#allocation5 + $0x780] sm:$0xff]
    %v284 = vld [vmem:[#allocation5 + $0x788] sm:$0xff]
    %v285 = vld [vmem:[#allocation5 + $0x790] sm:$0xff]
    %v286 = vld [vmem:[#allocation5 + $0x798] sm:$0xff]
    %v287 = vld [vmem:[#allocation5 + $0x7a0] sm:$0xff]
    %v288 = vld [vmem:[#allocation5 + $0x7a8] sm:$0xff]
    %v289 = vld [vmem:[#allocation5 + $0x7b0] sm:$0xff]
    %v290 = vld [vmem:[#allocation5 + $0x7b8] sm:$0xff]
    %v291 = vld [vmem:[#allocation5 + $0x7c0] sm:$0xff]
    %v292 = vld [vmem:[#allocation5 + $0x7c8] sm:$0xff]
    %v293 = vld [vmem:[#allocation5 + $0x7d0] sm:$0xff]
    %v294 = vld [vmem:[#allocation5 + $0x7d8] sm:$0xff]
    %v295 = vld [vmem:[#allocation5 + $0x7e0] sm:$0xff]
    %v296 = vld [vmem:[#allocation5 + $0x7e8] sm:$0xff]
    %v297 = vld [vmem:[#allocation5 + $0x7f0] sm:$0xff]
    %v298 = vld [vmem:[#allocation5 + $0x7f8] sm:$0xff]
    %v299 = vld [vmem:[%s2] sm:$0x3]
    %v301 = vlaneseq
    %v302 = vshrl.u32 %v301, 7
    %v303 = vsub.s32 0, %v302
    %v304 = vrot.slane %v299, %v303
    %v305 = vlaneseq
    %v306 = vshrl.u32 %v305, 7
    %v307 = vsub.s32 1, %v306
    %v308 = vrot.slane %v299, %v307
    %v313 = vcombine.high %v41, %v41
    %v315 = vunpack.c.l.s4 1983009808
    %v316 = vunpack.c.0.s8 %v315
    %v317 = vlaneseq
    %v318 = vshrl.u32 %v317, 7
    %v319 = vsub.s32 %v316, %v318
    %v320 = vrot.slane %v41, %v319
    %v322 = vunpack.c.l.s4 1983009808
    %v323 = vunpack.c.0.s8 %v322
    %v324 = vlaneseq
    %v325 = vshrl.u32 %v324, 7
    %v326 = vsub.s32 %v323, %v325
    %v327 = vrot.slane %v313, %v326
    %v328 = vcombine.high %v320, %v320
    %v329 = vcombine.high %v327, %v327
    %v330 = vcombine.high %v42, %v42
    %v332 = vunpack.c.l.s4 1983009808
    %v333 = vunpack.c.0.s8 %v332
    %v334 = vlaneseq
    %v335 = vshrl.u32 %v334, 7
    %v336 = vsub.s32 %v333, %v335
    %v337 = vrot.slane %v42, %v336
    %v339 = vunpack.c.l.s4 1983009808
    %v340 = vunpack.c.0.s8 %v339
    %v341 = vlaneseq
    %v342 = vshrl.u32 %v341, 7
    %v343 = vsub.s32 %v340, %v342
    %v344 = vrot.slane %v330, %v343
    %v345 = vcombine.high %v337, %v337
    %v346 = vcombine.high %v344, %v344
    %355 = vmatprep.subr.mxu0 %v74
    %356 = vmatpush1.msra.mxu0 %v73
    %357 = vmatprep.subr.mxu0 %v72
    %358 = vmatpush1.msra.mxu0 %v71
    %359 = vmatprep.subr.mxu0 %v70
    %360 = vmatpush1.msra.mxu0 %v69
    %361 = vmatprep.subr.mxu0 %v68
    %362 = vmatpush1.msra.mxu0 %v67
    %363 = vmatprep.subr.mxu0 %v66
    %364 = vmatpush1.msra.mxu0 %v65
    %365 = vmatprep.subr.mxu0 %v64
    %366 = vmatpush1.msra.mxu0 %v63
    %367 = vmatprep.subr.mxu0 %v62
    %368 = vmatpush1.msra.mxu0 %v61
    %369 = vmatprep.subr.mxu0 %v60
    %370 = vmatpush1.msra.mxu0 %v59
    %371 = vmatprep.subr.mxu0 %v58
    %372 = vmatpush1.msra.mxu0 %v57
    %373 = vmatprep.subr.mxu0 %v56
    %374 = vmatpush1.msra.mxu0 %v55
    %375 = vmatprep.subr.mxu0 %v54
    %376 = vmatpush1.msra.mxu0 %v53
    %377 = vmatprep.subr.mxu0 %v52
    %378 = vmatpush1.msra.mxu0 %v51
    %379 = vmatprep.subr.mxu0 %v50
    %380 = vmatpush1.msra.mxu0 %v49
    %381 = vmatprep.subr.mxu0 %v48
    %382 = vmatpush1.msra.mxu0 %v47
    %383 = vmatprep.subr.mxu0 %v46
    %384 = vmatpush1.msra.mxu0 %v45
    %385 = vmatprep.subr.mxu0 %v44
    %386 = vmatpush1.msra.mxu0 %v43
    %387 = vmatprep.subr.mxu0 %v106
    %388 = vmatpush2.msra.mxu0 %v105
    %389 = vmatprep.subr.mxu0 %v104
    %390 = vmatpush2.msra.mxu0 %v103
    %391 = vmatprep.subr.mxu0 %v102
    %392 = vmatpush2.msra.mxu0 %v101
    %393 = vmatprep.subr.mxu0 %v100
    %394 = vmatpush2.msra.mxu0 %v99
    %395 = vmatprep.subr.mxu0 %v98
    %396 = vmatpush2.msra.mxu0 %v97
    %397 = vmatprep.subr.mxu0 %v96
    %398 = vmatpush2.msra.mxu0 %v95
    %399 = vmatprep.subr.mxu0 %v94
    %400 = vmatpush2.msra.mxu0 %v93
    %401 = vmatprep.subr.mxu0 %v92
    %402 = vmatpush2.msra.mxu0 %v91
    %403 = vmatprep.subr.mxu0 %v90
    %404 = vmatpush2.msra.mxu0 %v89
    %405 = vmatprep.subr.mxu0 %v88
    %406 = vmatpush2.msra.mxu0 %v87
    %407 = vmatprep.subr.mxu0 %v86
    %408 = vmatpush2.msra.mxu0 %v85
    %409 = vmatprep.subr.mxu0 %v84
    %410 = vmatpush2.msra.mxu0 %v83
    %411 = vmatprep.subr.mxu0 %v82
    %412 = vmatpush2.msra.mxu0 %v81
    %413 = vmatprep.subr.mxu0 %v80
    %414 = vmatpush2.msra.mxu0 %v79
    %415 = vmatprep.subr.mxu0 %v78
    %416 = vmatpush2.msra.mxu0 %v77
    %417 = vmatprep.subr.mxu0 %v76
    %418 = vmatpush2.msra.mxu0 %v75
    %419 = vmatprep.mubr.f32.mxu0 %v328
    %420 = vmatmul.mubr.f32.gmra.mxu0 %v320
    %v421 = vpop.f32.mrf.mxu0
    %v422 = vadd.f32 %v304, %v421
    %v423 = vpop.f32.mrf.mxu0
    %v424 = vadd.f32 %v308, %v423
    %425 = vdwg.mxu0
    %426 = vmatprep.subr.mxu0 %v138
    %427 = vmatpush1.msra.mxu0 %v137
    %428 = vmatprep.subr.mxu0 %v136
    %429 = vmatpush1.msra.mxu0 %v135
    %430 = vmatprep.subr.mxu0 %v134
    %431 = vmatpush1.msra.mxu0 %v133
    %432 = vmatprep.subr.mxu0 %v132
    %433 = vmatpush1.msra.mxu0 %v131
    %434 = vmatprep.subr.mxu0 %v130
    %435 = vmatpush1.msra.mxu0 %v129
    %436 = vmatprep.subr.mxu0 %v128
    %437 = vmatpush1.msra.mxu0 %v127
    %438 = vmatprep.subr.mxu0 %v126
    %439 = vmatpush1.msra.mxu0 %v125
    %440 = vmatprep.subr.mxu0 %v124
    %441 = vmatpush1.msra.mxu0 %v123
    %442 = vmatprep.subr.mxu0 %v122
    %443 = vmatpush1.msra.mxu0 %v121
    %444 = vmatprep.subr.mxu0 %v120
    %445 = vmatpush1.msra.mxu0 %v119
    %446 = vmatprep.subr.mxu0 %v118
    %447 = vmatpush1.msra.mxu0 %v117
    %448 = vmatprep.subr.mxu0 %v116
    %449 = vmatpush1.msra.mxu0 %v115
    %450 = vmatprep.subr.mxu0 %v114
    %451 = vmatpush1.msra.mxu0 %v113
    %452 = vmatprep.subr.mxu0 %v112
    %453 = vmatpush1.msra.mxu0 %v111
    %454 = vmatprep.subr.mxu0 %v110
    %455 = vmatpush1.msra.mxu0 %v109
    %456 = vmatprep.subr.mxu0 %v108
    %457 = vmatpush1.msra.mxu0 %v107
    %458 = vmatprep.subr.mxu0 %v170
    %459 = vmatpush2.msra.mxu0 %v169
    %460 = vmatprep.subr.mxu0 %v168
    %461 = vmatpush2.msra.mxu0 %v167
    %462 = vmatprep.subr.mxu0 %v166
    %463 = vmatpush2.msra.mxu0 %v165
    %464 = vmatprep.subr.mxu0 %v164
    %465 = vmatpush2.msra.mxu0 %v163
    %466 = vmatprep.subr.mxu0 %v162
    %467 = vmatpush2.msra.mxu0 %v161
    %468 = vmatprep.subr.mxu0 %v160
    %469 = vmatpush2.msra.mxu0 %v159
    %470 = vmatprep.subr.mxu0 %v158
    %471 = vmatpush2.msra.mxu0 %v157
    %472 = vmatprep.subr.mxu0 %v156
    %473 = vmatpush2.msra.mxu0 %v155
    %474 = vmatprep.subr.mxu0 %v154
    %475 = vmatpush2.msra.mxu0 %v153
    %476 = vmatprep.subr.mxu0 %v152
    %477 = vmatpush2.msra.mxu0 %v151
    %478 = vmatprep.subr.mxu0 %v150
    %479 = vmatpush2.msra.mxu0 %v149
    %480 = vmatprep.subr.mxu0 %v148
    %481 = vmatpush2.msra.mxu0 %v147
    %482 = vmatprep.subr.mxu0 %v146
    %483 = vmatpush2.msra.mxu0 %v145
    %484 = vmatprep.subr.mxu0 %v144
    %485 = vmatpush2.msra.mxu0 %v143
    %486 = vmatprep.subr.mxu0 %v142
    %487 = vmatpush2.msra.mxu0 %v141
    %488 = vmatprep.subr.mxu0 %v140
    %489 = vmatpush2.msra.mxu0 %v139
    %490 = vmatprep.mubr.f32.mxu0 %v329
    %491 = vmatmul.mubr.f32.gmra.mxu0 %v327
    %v492 = vpop.f32.mrf.mxu0
    %v493 = vadd.f32 %v422, %v492
    %v494 = vpop.f32.mrf.mxu0
    %v495 = vadd.f32 %v424, %v494
    %496 = vdwg.mxu0
    %497 = vmatprep.subr.mxu0 %v202
    %498 = vmatpush1.msra.mxu0 %v201
    %499 = vmatprep.subr.mxu0 %v200
    %500 = vmatpush1.msra.mxu0 %v199
    %501 = vmatprep.subr.mxu0 %v198
    %502 = vmatpush1.msra.mxu0 %v197
    %503 = vmatprep.subr.mxu0 %v196
    %504 = vmatpush1.msra.mxu0 %v195
    %505 = vmatprep.subr.mxu0 %v194
    %506 = vmatpush1.msra.mxu0 %v193
    %507 = vmatprep.subr.mxu0 %v192
    %508 = vmatpush1.msra.mxu0 %v191
    %509 = vmatprep.subr.mxu0 %v190
    %510 = vmatpush1.msra.mxu0 %v189
    %511 = vmatprep.subr.mxu0 %v188
    %512 = vmatpush1.msra.mxu0 %v187
    %513 = vmatprep.subr.mxu0 %v186
    %514 = vmatpush1.msra.mxu0 %v185
    %515 = vmatprep.subr.mxu0 %v184
    %516 = vmatpush1.msra.mxu0 %v183
    %517 = vmatprep.subr.mxu0 %v182
    %518 = vmatpush1.msra.mxu0 %v181
    %519 = vmatprep.subr.mxu0 %v180
    %520 = vmatpush1.msra.mxu0 %v179
    %521 = vmatprep.subr.mxu0 %v178
    %522 = vmatpush1.msra.mxu0 %v177
    %523 = vmatprep.subr.mxu0 %v176
    %524 = vmatpush1.msra.mxu0 %v175
    %525 = vmatprep.subr.mxu0 %v174
    %526 = vmatpush1.msra.mxu0 %v173
    %527 = vmatprep.subr.mxu0 %v172
    %528 = vmatpush1.msra.mxu0 %v171
    %529 = vmatprep.subr.mxu0 %v234
    %530 = vmatpush2.msra.mxu0 %v233
    %531 = vmatprep.subr.mxu0 %v232
    %532 = vmatpush2.msra.mxu0 %v231
    %533 = vmatprep.subr.mxu0 %v230
    %534 = vmatpush2.msra.mxu0 %v229
    %535 = vmatprep.subr.mxu0 %v228
    %536 = vmatpush2.msra.mxu0 %v227
    %537 = vmatprep.subr.mxu0 %v226
    %538 = vmatpush2.msra.mxu0 %v225
    %539 = vmatprep.subr.mxu0 %v224
    %540 = vmatpush2.msra.mxu0 %v223
    %541 = vmatprep.subr.mxu0 %v222
    %542 = vmatpush2.msra.mxu0 %v221
    %543 = vmatprep.subr.mxu0 %v220
    %544 = vmatpush2.msra.mxu0 %v219
    %545 = vmatprep.subr.mxu0 %v218
    %546 = vmatpush2.msra.mxu0 %v217
    %547 = vmatprep.subr.mxu0 %v216
    %548 = vmatpush2.msra.mxu0 %v215
    %549 = vmatprep.subr.mxu0 %v214
    %550 = vmatpush2.msra.mxu0 %v213
    %551 = vmatprep.subr.mxu0 %v212
    %552 = vmatpush2.msra.mxu0 %v211
    %553 = vmatprep.subr.mxu0 %v210
    %554 = vmatpush2.msra.mxu0 %v209
    %555 = vmatprep.subr.mxu0 %v208
    %556 = vmatpush2.msra.mxu0 %v207
    %557 = vmatprep.subr.mxu0 %v206
    %558 = vmatpush2.msra.mxu0 %v205
    %559 = vmatprep.subr.mxu0 %v204
    %560 = vmatpush2.msra.mxu0 %v203
    %561 = vmatprep.mubr.f32.mxu0 %v345
    %562 = vmatmul.mubr.f32.gmra.mxu0 %v337
    %v563 = vpop.f32.mrf.mxu0
    %v564 = vadd.f32 %v493, %v563
    %v565 = vpop.f32.mrf.mxu0
    %v566 = vadd.f32 %v495, %v565
    %567 = vdwg.mxu0
    %568 = vmatprep.subr.mxu0 %v266
    %569 = vmatpush1.msra.mxu0 %v265
    %570 = vmatprep.subr.mxu0 %v264
    %571 = vmatpush1.msra.mxu0 %v263
    %572 = vmatprep.subr.mxu0 %v262
    %573 = vmatpush1.msra.mxu0 %v261
    %574 = vmatprep.subr.mxu0 %v260
    %575 = vmatpush1.msra.mxu0 %v259
    %576 = vmatprep.subr.mxu0 %v258
    %577 = vmatpush1.msra.mxu0 %v257
    %578 = vmatprep.subr.mxu0 %v256
    %579 = vmatpush1.msra.mxu0 %v255
    %580 = vmatprep.subr.mxu0 %v254
    %581 = vmatpush1.msra.mxu0 %v253
    %582 = vmatprep.subr.mxu0 %v252
    %583 = vmatpush1.msra.mxu0 %v251
    %584 = vmatprep.subr.mxu0 %v250
    %585 = vmatpush1.msra.mxu0 %v249
    %586 = vmatprep.subr.mxu0 %v248
    %587 = vmatpush1.msra.mxu0 %v247
    %588 = vmatprep.subr.mxu0 %v246
    %589 = vmatpush1.msra.mxu0 %v245
    %590 = vmatprep.subr.mxu0 %v244
    %591 = vmatpush1.msra.mxu0 %v243
    %592 = vmatprep.subr.mxu0 %v242
    %593 = vmatpush1.msra.mxu0 %v241
    %594 = vmatprep.subr.mxu0 %v240
    %595 = vmatpush1.msra.mxu0 %v239
    %596 = vmatprep.subr.mxu0 %v238
    %597 = vmatpush1.msra.mxu0 %v237
    %598 = vmatprep.subr.mxu0 %v236
    %599 = vmatpush1.msra.mxu0 %v235
    %600 = vmatprep.subr.mxu0 %v298
    %601 = vmatpush2.msra.mxu0 %v297
    %602 = vmatprep.subr.mxu0 %v296
    %603 = vmatpush2.msra.mxu0 %v295
    %604 = vmatprep.subr.mxu0 %v294
    %605 = vmatpush2.msra.mxu0 %v293
    %606 = vmatprep.subr.mxu0 %v292
    %607 = vmatpush2.msra.mxu0 %v291
    %608 = vmatprep.subr.mxu0 %v290
    %609 = vmatpush2.msra.mxu0 %v289
    %610 = vmatprep.subr.mxu0 %v288
    %611 = vmatpush2.msra.mxu0 %v287
    %612 = vmatprep.subr.mxu0 %v286
    %613 = vmatpush2.msra.mxu0 %v285
    %614 = vmatprep.subr.mxu0 %v284
    %615 = vmatpush2.msra.mxu0 %v283
    %616 = vmatprep.subr.mxu0 %v282
    %617 = vmatpush2.msra.mxu0 %v281
    %618 = vmatprep.subr.mxu0 %v280
    %619 = vmatpush2.msra.mxu0 %v279
    %620 = vmatprep.subr.mxu0 %v278
    %621 = vmatpush2.msra.mxu0 %v277
    %622 = vmatprep.subr.mxu0 %v276
    %623 = vmatpush2.msra.mxu0 %v275
    %624 = vmatprep.subr.mxu0 %v274
    %625 = vmatpush2.msra.mxu0 %v273
    %626 = vmatprep.subr.mxu0 %v272
    %627 = vmatpush2.msra.mxu0 %v271
    %628 = vmatprep.subr.mxu0 %v270
    %629 = vmatpush2.msra.mxu0 %v269
    %630 = vmatprep.subr.mxu0 %v268
    %631 = vmatpush2.msra.mxu0 %v267
    %632 = vmatprep.mubr.f32.mxu0 %v346
    %633 = vmatmul.mubr.f32.gmra.mxu0 %v344
    %v634 = vpop.f32.mrf.mxu0
    %v635 = vadd.f32 %v564, %v634
    %v636 = vpop.f32.mrf.mxu0
    %v637 = vadd.f32 %v566, %v636
    %638 = vdwg.mxu0
    %639 = vst [vmem:[#allocation7] sm:$0x3] %v635
    %640 = vst [vmem:[#allocation7 + $0x8] sm:$0x3] %v637
    // Predicated region
    $region22: #{tpu_custom_call.1} parent=1 // pred_check
      _
    $region23: #{tpu_custom_call.1} parent=1 // pred_check_branch
      %642 = sbr.rel (0) target = $region25
    $region24: #{tpu_custom_call.1} parent=1 // pred_region
      %s644 = ssub.s32 256, 256
      %645 = vsyncadd [#allocation4], %s644
      %s647 = sshll.u32 [#allocation7], 4
      %s648 = int_to_ptr.vmem [resolvable:$true] %s647
      %650 = dma.vmem_to_hbm [thread:$0]  %s648, 256, %s3, [#allocation4]
    $region25: #{tpu_custom_call.1} parent=1 // pred_fallthru
      _
    // Predicated region
    $region26: #{tpu_custom_call.1} parent=1 // pred_check
      _
    $region27: #{tpu_custom_call.1} parent=1 // pred_check_branch
      %652 = sbr.rel (0) target = $region29
    $region28: #{tpu_custom_call.1} parent=1 // pred_region
      %653 = dma.done [#allocation4], 256
    $region29: #{tpu_custom_call.1} parent=1 // pred_fallthru
      _
    %654 = vsyncpa [#allocation3], 1
    %655 = vsyncpa [#allocation6], 1
    %656 = vsyncpa [#allocation4], 1

</llo_original>
